<compile_context>
chip_gen: v7x
topology: tpu7x:2x2x1
jax: 0.10.0
libtpu: 0.0.40
codegen_flags: <defaults>
</compile_context>

<pallas_src>
import functools

import jax
import jax.numpy as jnp
from jax.experimental import pallas as pl
from jax.experimental.pallas import tpu as pltpu


# ---------------------------------------------------------------------------
# Host-side schedule logic — mirrors _adjust_alpha / _adjust_lambda.
# round_idx is a static Python int, so these are plain Python.
# ---------------------------------------------------------------------------
def _adjust_alpha(base_alpha, round_idx):
    if round_idx < 20:
        return max(0.2, base_alpha - 0.2)
    elif round_idx > 80:
        return min(0.8, base_alpha + 0.2)
    return base_alpha


def _adjust_lambda(base_lambda, round_idx):
    if round_idx < 30:
        return min(0.5, base_lambda * 2.0)
    elif round_idx > 70:
        return max(0.05, base_lambda * 0.5)
    return base_lambda


# ---------------------------------------------------------------------------
# Chip-aware sizing helpers
# ---------------------------------------------------------------------------
def _vmem_capacity_bytes():
    try:
        return int(pltpu.get_tpu_info().vmem_capacity_bytes)
    except Exception:
        return 64 * 2**20            # conservative (v7x per-TC) fallback


def _pick_batch_tile(B):
    """Largest tb that is a multiple of 8 (output-sublane rule), divides B and
    leaves >= 2 batch blocks (v7x megacore).  Falls back to tb == B."""
    cands = [d for d in range(8, B // 2 + 1, 8) if B % d == 0]
    return max(cands) if cands else B


def _pick_channel_tile(C, tb, itemsize, s_floor, budget):
    """Largest tc that is a multiple of 128 (lane-dense output / sublane-ok
    input), divides C, and keeps one input block within budget.  Falls back to
    tc == C (the full dim is always layout-legal)."""
    cands = [d for d in range(128, C, 128)
             if C % d == 0 and tb * d * s_floor * itemsize <= budget]
    return max(cands) if cands else C


# ---------------------------------------------------------------------------
# Kernel 1: streamed spatial mean-pool  (B, C, S) -> (B, C), f32 accumulation
# ---------------------------------------------------------------------------
def _pool_kernel(inv_s, s_total, ts, needs_mask, feat_ref, out_ref):
    s = pl.program_id(2)
    last = pl.num_programs(2) - 1

    @pl.when(s == 0)
    def _():
        out_ref[...] = jnp.zeros_like(out_ref)

    if needs_mask:
        # Only the final (partial) spatial block pays for the mask.
        @pl.when(s < last)
        def _():
            out_ref[...] += jnp.sum(feat_ref[...].astype(jnp.float32), axis=-1)

        @pl.when(s == last)
        def _():
            x = feat_ref[...].astype(jnp.float32)
            # (1, 1, ts) iota broadcast through the select — not a full-block iota.
            pos = s * ts + jax.lax.broadcasted_iota(jnp.int32, (1, 1, ts), 2)
            x = jnp.where(pos < s_total, x, 0.0)
            out_ref[...] += jnp.sum(x, axis=-1)
            out_ref[...] = out_ref[...] * inv_s
    else:
        out_ref[...] += jnp.sum(feat_ref[...].astype(jnp.float32), axis=-1)

        @pl.when(s == last)
        def _():
            out_ref[...] = out_ref[...] * inv_s


def _spatial_mean_pool(feat_bcs, force_ts=None):
    """feat_bcs: (B, C, S) in its native dtype. Returns f32 (B, C) mean over S.

    force_ts is a test hook to exercise the partial-final-block mask path.
    """
    B, C, S = feat_bcs.shape
    itemsize = jnp.dtype(feat_bcs.dtype).itemsize

    vmem_cap = _vmem_capacity_bytes()
    # ~8 MiB blocks on v7x (64 MiB VMEM/TC), ~16 MiB on v5e/v6e (128 MiB).
    budget = int(min(16 * 2**20, max(4 * 2**20, vmem_cap // 8)))

    # Batch tile (output sublane dim): multiple of 8 or == B.
    tb = _pick_batch_tile(B)
    nb = B // tb

    # Channel tile (input sublane / output lane dim): multiple of 128 or == C.
    s_floor = min(S, 128)
    tc = C
    if nb < 2 or tb * C * s_floor * itemsize > budget:
        tc = _pick_channel_tile(C, tb, itemsize, s_floor, budget)
    nc = C // tc

    # Spatial tile (input lane dim): multiple of 128 or == S.
    if force_ts is not None:
        ts = int(force_ts)
    else:
        elem_budget = budget // max(1, tb * tc * itemsize)
        if elem_budget >= S:
            ts = S
        else:
            ts = max(128, (elem_budget // 128) * 128)
            if ts >= S:
                ts = S
    ns = int(pl.cdiv(S, ts))
    needs_mask = (S % ts) != 0

    in_block = tb * tc * ts * itemsize
    out_block = tb * tc * 4
    vmem_limit = int(min(3 * vmem_cap // 4,
                         max(4 * 2**20, 3 * in_block + 2 * out_block + 2 * 2**20)))

    kernel = functools.partial(_pool_kernel, float(1.0 / S), int(S), int(ts),
                               bool(needs_mask))

    return pl.pallas_call(
        kernel,
        out_shape=jax.ShapeDtypeStruct((B, C), jnp.float32),
        grid_spec=pltpu.PrefetchScalarGridSpec(
            num_scalar_prefetch=0,
            grid=(nb, nc, ns),
            in_specs=[pl.BlockSpec((tb, tc, ts), lambda b, c, s: (b, c, s))],
            out_specs=pl.BlockSpec((tb, tc), lambda b, c, s: (b, c)),
        ),
        compiler_params=pltpu.CompilerParams(
            dimension_semantics=("parallel", "parallel", "arbitrary"),
            vmem_limit_bytes=vmem_limit),
    )(feat_bcs)


def _pool_features(f):
    """adaptive_avg_pool2d((1,1)) + flatten for NCHW conv features.

    NCHW -> (B, C, H*W) is a free reshape (no transpose, no extra HBM pass);
    the kernel reduces over the lane-dense spatial axis.  2-D features are
    used as-is (matches PyTorch)."""
    if f.ndim > 2:
        B, C = f.shape[0], f.shape[1]
        return _spatial_mean_pool(f.reshape(B, C, -1))
    return f.astype(jnp.float32)


# ---------------------------------------------------------------------------
# Kernel 2: CE + projection + cosine alignment + loss combination
# ---------------------------------------------------------------------------
def _ce_from_logits(logits, tgt):
    """Mean cross-entropy; target column picked via iota mask (no one-hot)."""
    m = jnp.max(logits, axis=-1, keepdims=True)
    z = logits - m
    lse = jnp.log(jnp.sum(jnp.exp(z), axis=-1, keepdims=True))
    logp = z - lse
    col = jax.lax.broadcasted_iota(jnp.int32, logits.shape, 1)
    picked = jnp.where(col == tgt, logp, 0.0)
    return jnp.mean(-jnp.sum(picked, axis=-1))


def _l2_normalize(x):
    """F.normalize(x, dim=1) via rsqrt (EUP slot) instead of sqrt + divide."""
    ss = jnp.sum(x * x, axis=-1, keepdims=True)
    return x * jax.lax.rsqrt(jnp.maximum(ss, 1e-24))   # clamp ||x|| at 1e-12


def _combine_kernel(proj_mode, params_ref, llog_ref, glog_ref, tgt_ref,
                    lpool_ref, gpool_ref, proj_ref, out_ref):
    alpha = params_ref[0]          # dynamic alpha (SMEM scalar, no recompile)
    lam = params_ref[1]            # dynamic lambda

    tgt = tgt_ref[...]             # (B, 1) int32

    local_loss = _ce_from_logits(llog_ref[...].astype(jnp.float32), tgt)
    global_loss = _ce_from_logits(glog_ref[...].astype(jnp.float32), tgt)

    lpool = lpool_ref[...]
    gpool = gpool_ref[...]
    if proj_mode == 1:      # local dim > global dim: project local down
        lpool = jnp.dot(lpool, proj_ref[...], preferred_element_type=jnp.float32)
    elif proj_mode == 2:    # global dim > local dim: project global down
        gpool = jnp.dot(gpool, proj_ref[...], preferred_element_type=jnp.float32)

    ln = _l2_normalize(lpool)
    gn = _l2_normalize(gpool)
    cos_sim = jnp.sum(ln * gn, axis=-1)                 # (B,)
    feature_loss = jnp.mean(1.0 - cos_sim)

    total = (alpha * local_loss
             + (1.0 - alpha) * global_loss
             + lam * feature_loss)

    # Single fused (1, 4) output instead of four separate (1, 1) writebacks.
    col = jax.lax.broadcasted_iota(jnp.int32, (1, 4), 1)
    out_ref[...] = jnp.where(col == 0, total,
                    jnp.where(col == 1, local_loss,
                     jnp.where(col == 2, global_loss, feature_loss)))


def _combine(local_logits, global_logits, targets, lpool, gpool, projection,
             alpha, lam):
    tgt2d = targets.astype(jnp.int32)[:, None]           # (B, 1), no one-hot
    params = jnp.asarray([alpha, lam], jnp.float32)       # SMEM scalars

    Cl, Cg = int(lpool.shape[1]), int(gpool.shape[1])
    if Cl == Cg:
        proj_mode = 0
        proj = jnp.zeros((1, 1), jnp.float32)             # unused placeholder
    else:
        if projection is None:
            raise ValueError("projection matrix required when feature dims differ")
        proj = projection.astype(jnp.float32)
        if proj.shape[0] != max(Cl, Cg):                  # mirror torch proj[:dim, :]
            proj = proj[:max(Cl, Cg), :]
        proj_mode = 1 if Cl > Cg else 2

    vmem_cap = _vmem_capacity_bytes()
    tot_bytes = (local_logits.nbytes + global_logits.nbytes + tgt2d.nbytes +
                 lpool.nbytes + gpool.nbytes + proj.nbytes)
    vmem_limit = int(min(3 * vmem_cap // 4,
                         max(4 * 2**20, 2 * tot_bytes + 2 * 2**20)))

    smem_spec = pl.BlockSpec(memory_space=pltpu.MemorySpace.SMEM)
    vmem_spec = pl.BlockSpec(memory_space=pltpu.MemorySpace.VMEM)
    kernel = functools.partial(_combine_kernel, int(proj_mode))

    out = pl.pallas_call(
        kernel,
        out_shape=jax.ShapeDtypeStruct((1, 4), jnp.float32),
        in_specs=[smem_spec] + [vmem_spec] * 6,
        out_specs=vmem_spec,
        compiler_params=pltpu.CompilerParams(vmem_limit_bytes=vmem_limit),
    )(params, local_logits, global_logits, tgt2d, lpool, gpool, proj)

    return out[0, 0], out[0, 1], out[0, 2], out[0, 3]


# ---------------------------------------------------------------------------
# Public wrapper
# ---------------------------------------------------------------------------
def tierhfl_loss(local_logits, global_logits, local_features, global_features,
                 targets, projection=None, *, alpha=0.5, lambda_feature=0.1,
                 round_idx=0):
    """Returns (total_loss, local_loss, global_loss, feature_loss) as scalars."""
    dyn_alpha = float(_adjust_alpha(alpha, round_idx))
    dyn_lambda = float(_adjust_lambda(lambda_feature, round_idx))

    lpool = _pool_features(local_features)
    gpool = _pool_features(global_features)

    return _combine(local_logits, global_logits, targets, lpool, gpool,
                    projection, dyn_alpha, dyn_lambda)


# ---------------------------------------------------------------------------
# Pure-JAX reference (for sanity checking the kernels)
# ---------------------------------------------------------------------------
def _reference(local_logits, global_logits, lfeat, gfeat, targets, proj,
               alpha, lam, round_idx):
    def ce(logits, t):
        logp = jax.nn.log_softmax(logits.astype(jnp.float32), axis=-1)
        return -jnp.mean(jnp.take_along_axis(logp, t[:, None], axis=-1))

    ll = ce(local_logits, targets)
    gl = ce(global_logits, targets)

    lf = lfeat.astype(jnp.float32)
    gf = gfeat.astype(jnp.float32)
    lp = jnp.mean(lf.reshape(lf.shape[0], lf.shape[1], -1), axis=-1)
    gp = jnp.mean(gf.reshape(gf.shape[0], gf.shape[1], -1), axis=-1)
    if lp.shape[1] != gp.shape[1]:
        if lp.shape[1] > gp.shape[1]:
            lp = jnp.dot(lp, proj[:lp.shape[1], :], precision="highest")
        else:
            gp = jnp.dot(gp, proj[:gp.shape[1], :], precision="highest")
    ln = lp / jnp.maximum(jnp.linalg.norm(lp, axis=1, keepdims=True), 1e-12)
    gn = gp / jnp.maximum(jnp.linalg.norm(gp, axis=1, keepdims=True), 1e-12)
    fl = jnp.mean(1.0 - jnp.sum(ln * gn, axis=1))

    a = _adjust_alpha(alpha, round_idx)
    l = _adjust_lambda(lam, round_idx)
    return a * ll + (1 - a) * gl + l * fl, ll, gl, fl


# ---------------------------------------------------------------------------
if __name__ == "__main__":
    key = jax.random.PRNGKey(0)
    k1, k2, k3, k4, k5, kp, km = jax.random.split(key, 7)

    B, NUM_CLASSES = 8, 10
    CL, CG = 32, 64          # mismatched feature dims -> exercises projection
    H, W = 8, 8
    HG, WG = 4, 4

    local_logits = jax.random.normal(k1, (B, NUM_CLASSES), jnp.float32)
    global_logits = jax.random.normal(k2, (B, NUM_CLASSES), jnp.float32)
    local_features = jax.random.normal(k3, (B, CL, H, W), jnp.float32)     # NCHW
    global_features = jax.random.normal(k4, (B, CG, HG, WG), jnp.float32)  # NCHW
    targets = jax.random.randint(k5, (B,), 0, NUM_CLASSES, jnp.int32)

    # deterministic synthetic projection matrix (torch.randn(max_dim, min_dim))
    projection = jax.random.normal(kp, (max(CL, CG), min(CL, CG)), jnp.float32)

    outs = tierhfl_loss(local_logits, global_logits, local_features,
                        global_features, targets, projection,
                        alpha=0.5, lambda_feature=0.1, round_idx=0)
    outs = jax.block_until_ready(outs)

    refs = _reference(local_logits, global_logits, local_features,
                      global_features, targets, projection, 0.5, 0.1, 0)
    for got, ref in zip(outs, refs):
        assert jnp.allclose(got, ref, rtol=5e-3, atol=5e-3), (got, ref)

    # Partial-final-block mask path: S=144 with a forced 128-lane spatial tile.
    xm = jax.random.normal(km, (8, 32, 144), jnp.float32)
    got_m = jax.block_until_ready(_spatial_mean_pool(xm, force_ts=128))
    ref_m = jnp.mean(xm, axis=-1)
    assert jnp.allclose(got_m, ref_m, rtol=1e-4, atol=1e-4)

    # bf16-on-the-wire smoke test: features stay bf16 across the HBM->VMEM DMA;
    # the pooling kernel accumulates in f32 internally.
    outs_bf16 = tierhfl_loss(local_logits, global_logits,
                             local_features.astype(jnp.bfloat16),
                             global_features.astype(jnp.bfloat16),
                             targets, projection,
                             alpha=0.5, lambda_feature=0.1, round_idx=0)
    outs_bf16 = jax.block_until_ready(outs_bf16)
    assert all(bool(jnp.isfinite(v)) for v in outs_bf16)

    print("KERNEL_OK")
</pallas_src>

<mosaic_0001>
module attributes {stable_mosaic.version = 11 : i64} {
  func.func @_pool_kernel(%arg0: i32, %arg1: i32, %arg2: i32, %arg3: memref<8x32x64xf32, #tpu.memory_space<vmem>>, %arg4: memref<8x32xf32, #tpu.memory_space<vmem>>) attributes {dimension_semantics = [#tpu.dimension_semantics<parallel>, #tpu.dimension_semantics<parallel>, #tpu.dimension_semantics<arbitrary>], iteration_bounds = array<i64: 1, 1, 1>, scalar_prefetch = 0 : i64, scratch_operands = 0 : i64, tpu.core_type = #tpu.core_type<tc>, window_params = [{transform_indices = @transform_0, window_bounds = array<i64: 8, 32, 64>}, {transform_indices = @transform_1, window_bounds = array<i64: 8, 32>}]} {
    %c0_i32 = arith.constant 0 : i32
    %0 = arith.cmpi eq, %arg2, %c0_i32 : i32
    %1 = arith.extui %0 : i1 to i32
    %c0_i32_0 = arith.constant 0 : i32
    %2 = arith.cmpi ne, %1, %c0_i32_0 : i32
    scf.if %2 {
      %cst_9 = arith.constant 0.000000e+00 : f32
      %11 = vector.broadcast %cst_9 : f32 to vector<8x32xf32>
      %c0_10 = arith.constant 0 : index
      %c0_11 = arith.constant 0 : index
      %12 = vector.load %arg4[%c0_10, %c0_11] : memref<8x32xf32, #tpu.memory_space<vmem>>, vector<8x32xf32>
      tpu.vector_store %arg4[%c0_10, %c0_11], %11 {strides = array<i32>} : memref<8x32xf32, #tpu.memory_space<vmem>>, vector<8x32xf32>,
    } else {
    }
    %c0 = arith.constant 0 : index
    %c0_1 = arith.constant 0 : index
    %3 = vector.load %arg4[%c0, %c0_1] : memref<8x32xf32, #tpu.memory_space<vmem>>, vector<8x32xf32>
    %c0_2 = arith.constant 0 : index
    %c0_3 = arith.constant 0 : index
    %c0_4 = arith.constant 0 : index
    %4 = vector.load %arg3[%c0_2, %c0_3, %c0_4] : memref<8x32x64xf32, #tpu.memory_space<vmem>>, vector<8x32x64xf32>
    %cst = arith.constant dense<0.000000e+00> : vector<8x32xf32>
    %5 = vector.multi_reduction <add>, %4, %cst [2] : vector<8x32x64xf32> to vector<8x32xf32>
    %6 = arith.addf %3, %5 : vector<8x32xf32>
    %c0_5 = arith.constant 0 : index
    %c0_6 = arith.constant 0 : index
    %7 = vector.load %arg4[%c0_5, %c0_6] : memref<8x32xf32, #tpu.memory_space<vmem>>, vector<8x32xf32>
    tpu.vector_store %arg4[%c0_5, %c0_6], %6 {strides = array<i32>} : memref<8x32xf32, #tpu.memory_space<vmem>>, vector<8x32xf32>,
    %c0_i32_7 = arith.constant 0 : i32
    %8 = arith.cmpi eq, %arg2, %c0_i32_7 : i32
    %9 = arith.extui %8 : i1 to i32
    %c0_i32_8 = arith.constant 0 : i32
    %10 = arith.cmpi ne, %9, %c0_i32_8 : i32
    scf.if %10 {
      %c0_9 = arith.constant 0 : index
      %c0_10 = arith.constant 0 : index
      %11 = vector.load %arg4[%c0_9, %c0_10] : memref<8x32xf32, #tpu.memory_space<vmem>>, vector<8x32xf32>
      %cst_11 = arith.constant 1.562500e-02 : f32
      %12 = vector.broadcast %cst_11 : f32 to vector<8x32xf32>
      %13 = arith.mulf %11, %12 : vector<8x32xf32>
      %c0_12 = arith.constant 0 : index
      %c0_13 = arith.constant 0 : index
      %14 = vector.load %arg4[%c0_12, %c0_13] : memref<8x32xf32, #tpu.memory_space<vmem>>, vector<8x32xf32>
      tpu.vector_store %arg4[%c0_12, %c0_13], %13 {strides = array<i32>} : memref<8x32xf32, #tpu.memory_space<vmem>>, vector<8x32xf32>,
    } else {
    }
    return
  }
  func.func @transform_0(%arg0: i32, %arg1: i32, %arg2: i32) -> (i32, i32, i32) {
    %c0_i32 = arith.constant 0 : i32
    return %arg0, %arg1, %arg2 : i32, i32, i32
  }
  func.func @transform_1(%arg0: i32, %arg1: i32, %arg2: i32) -> (i32, i32) {
    %c0_i32 = arith.constant 0 : i32
    return %arg0, %arg1 : i32, i32
  }
}

</mosaic_0001>

<llo_original>
// kernel: tpu_custom_call.1
$region0: #{tpu_custom_call.1}
  #allocation0 [shape = 'u32[]', space=smem, size = 0x4, offset = 0x4, fixed_abs, tag = 'smem constant byte address 0x4 - core index']
  #allocation1 [shape = 'u32[144,128]{1,0:T(1,128)}', space=vmem, size = 0x12000, scoped, tag = 'internal scratch']
  %s0 = inlined_call_operand.hbm [shape: f32[8,32,64], index: 0, kind: input, shape index: {}]
  %s1 = inlined_call_operand.hbm [shape: f32[8,32], index: 1, kind: output, shape index: {}]
  %s2 = sld [smem:[#allocation0]]
  $region26: #{tpu_custom_call.1} parent=0
    _
  %s4 = ssub.s32 1, %s2
  %s5 = scalar_select 0, %s4, %s2
  $region1: #{tpu_custom_call.1} parent=0
    #allocation2 [shape = 'u8[131072]{0}', space=vmem, size = 0x20000, scoped, tag = 'input window, operand 0, single buffered']
    #allocation3 [shape = 's32[1]{0}', space=sflag, size = 0x4, scoped, tag = 'scoped memory for tpu_custom_call.1']
    #allocation4 [shape = 's32[1]{0}', space=sflag, size = 0x4, scoped, tag = 'scoped memory for tpu_custom_call.1']
    #allocation5 [shape = 'u8[4096]{0}', space=vmem, size = 0x1000, scoped, tag = 'output window, operand 0, single buffered']
    %6 = vsyncpa [#allocation3], 0
    %7 = vsyncpa [#allocation4], 0
    // Predicated region
    $region2: #{tpu_custom_call.1} parent=1 // pred_check
      _
    $region3: #{tpu_custom_call.1} parent=1 // pred_check_branch
      %9 = sbr.rel (0) target = $region5
    $region4: #{tpu_custom_call.1} parent=1 // pred_region
      %s11 = ssub.s32 4096, 4096
      %12 = vsyncadd [#allocation3], %s11
      %s13 = sshll.u32 [#allocation2], 4
      %s14 = int_to_ptr.vmem [resolvable:$true] %s13
      %19 = dma.hbm_to_vmem [thread:$0]  %s0, 4096, %s14, [#allocation3], 128, 128, 8
    $region5: #{tpu_custom_call.1} parent=1 // pred_fallthru
      _
    // Predicated region
    $region6: #{tpu_custom_call.1} parent=1 // pred_check
      _
    $region7: #{tpu_custom_call.1} parent=1 // pred_check_branch
      %21 = sbr.rel (0) target = $region9
    $region8: #{tpu_custom_call.1} parent=1 // pred_region
      %22 = dma.done [#allocation3], 4096
    $region9: #{tpu_custom_call.1} parent=1 // pred_fallthru
      _
    %p23 = scmp.eq.s32.totalorder 0, 0
    // Predicated region
    $region10: #{tpu_custom_call.1} parent=1 // pred_check
      %p24 = pneg %p23
    $region11: #{tpu_custom_call.1} parent=1 // pred_check_branch
      %26 = sbr.rel (%p24) target = $region13
    $region12: #{tpu_custom_call.1} parent=1 // pred_region
      %vm27 = vcmask 261120
      %28 = vst.msk [vmem:[#allocation5] sm:$0xff] %vm27, 0.0
    $region13: #{tpu_custom_call.1} parent=1 // pred_fallthru
      _
    %v29 = vld [vmem:[#allocation5] sm:$0xff]
    %v30 = vld [vmem:[#allocation2] sm:$0xff]
    %v31 = vld [vmem:[#allocation2 + $0x8] sm:$0xff]
    %v32 = vld [vmem:[#allocation2 + $0x10] sm:$0xff]
    %v33 = vld [vmem:[#allocation2 + $0x18] sm:$0xff]
    %v34 = vld [vmem:[#allocation2 + $0x20] sm:$0xff]
    %v35 = vld [vmem:[#allocation2 + $0x28] sm:$0xff]
    %v36 = vld [vmem:[#allocation2 + $0x30] sm:$0xff]
    %v37 = vld [vmem:[#allocation2 + $0x38] sm:$0xff]
    %v38 = vld [vmem:[#allocation2 + $0x40] sm:$0xff]
    %v39 = vld [vmem:[#allocation2 + $0x48] sm:$0xff]
    %v40 = vld [vmem:[#allocation2 + $0x50] sm:$0xff]
    %v41 = vld [vmem:[#allocation2 + $0x58] sm:$0xff]
    %v42 = vld [vmem:[#allocation2 + $0x60] sm:$0xff]
    %v43 = vld [vmem:[#allocation2 + $0x68] sm:$0xff]
    %v44 = vld [vmem:[#allocation2 + $0x70] sm:$0xff]
    %v45 = vld [vmem:[#allocation2 + $0x78] sm:$0xff]
    %v46 = vld [vmem:[#allocation2 + $0x80] sm:$0xff]
    %v47 = vld [vmem:[#allocation2 + $0x88] sm:$0xff]
    %v48 = vld [vmem:[#allocation2 + $0x90] sm:$0xff]
    %v49 = vld [vmem:[#allocation2 + $0x98] sm:$0xff]
    %v50 = vld [vmem:[#allocation2 + $0xa0] sm:$0xff]
    %v51 = vld [vmem:[#allocation2 + $0xa8] sm:$0xff]
    %v52 = vld [vmem:[#allocation2 + $0xb0] sm:$0xff]
    %v53 = vld [vmem:[#allocation2 + $0xb8] sm:$0xff]
    %v54 = vld [vmem:[#allocation2 + $0xc0] sm:$0xff]
    %v55 = vld [vmem:[#allocation2 + $0xc8] sm:$0xff]
    %v56 = vld [vmem:[#allocation2 + $0xd0] sm:$0xff]
    %v57 = vld [vmem:[#allocation2 + $0xd8] sm:$0xff]
    %v58 = vld [vmem:[#allocation2 + $0xe0] sm:$0xff]
    %v59 = vld [vmem:[#allocation2 + $0xe8] sm:$0xff]
    %v60 = vld [vmem:[#allocation2 + $0xf0] sm:$0xff]
    %v61 = vld [vmem:[#allocation2 + $0xf8] sm:$0xff]
    %vm62 = vcmask 523264
    %v63 = vsel %vm62, %v30, 0.0
    %64 = vadd.xlane.f32.xlu0 %v63
    %v65 = vpop.xlane.xlu0 %64
    %v66 = vsel %vm62, %v31, 0.0
    %67 = vadd.xlane.f32.xlu0 %v66
    %v68 = vpop.xlane.xlu0 %67
    %v69 = vsel %vm62, %v32, 0.0
    %70 = vadd.xlane.f32.xlu0 %v69
    %v71 = vpop.xlane.xlu0 %70
    %v72 = vsel %vm62, %v33, 0.0
    %73 = vadd.xlane.f32.xlu0 %v72
    %v74 = vpop.xlane.xlu0 %73
    %v75 = vsel %vm62, %v34, 0.0
    %76 = vadd.xlane.f32.xlu0 %v75
    %v77 = vpop.xlane.xlu0 %76
    %v78 = vsel %vm62, %v35, 0.0
    %79 = vadd.xlane.f32.xlu0 %v78
    %v80 = vpop.xlane.xlu0 %79
    %v81 = vsel %vm62, %v36, 0.0
    %82 = vadd.xlane.f32.xlu0 %v81
    %v83 = vpop.xlane.xlu0 %82
    %v84 = vsel %vm62, %v37, 0.0
    %85 = vadd.xlane.f32.xlu0 %v84
    %v86 = vpop.xlane.xlu0 %85
    %v87 = vsel %vm62, %v38, 0.0
    %88 = vadd.xlane.f32.xlu0 %v87
    %v89 = vpop.xlane.xlu0 %88
    %v90 = vsel %vm62, %v39, 0.0
    %91 = vadd.xlane.f32.xlu0 %v90
    %v92 = vpop.xlane.xlu0 %91
    %v93 = vsel %vm62, %v40, 0.0
    %94 = vadd.xlane.f32.xlu0 %v93
    %v95 = vpop.xlane.xlu0 %94
    %v96 = vsel %vm62, %v41, 0.0
    %97 = vadd.xlane.f32.xlu0 %v96
    %v98 = vpop.xlane.xlu0 %97
    %v99 = vsel %vm62, %v42, 0.0
    %100 = vadd.xlane.f32.xlu0 %v99
    %v101 = vpop.xlane.xlu0 %100
    %v102 = vsel %vm62, %v43, 0.0
    %103 = vadd.xlane.f32.xlu0 %v102
    %v104 = vpop.xlane.xlu0 %103
    %v105 = vsel %vm62, %v44, 0.0
    %106 = vadd.xlane.f32.xlu0 %v105
    %v107 = vpop.xlane.xlu0 %106
    %v108 = vsel %vm62, %v45, 0.0
    %109 = vadd.xlane.f32.xlu0 %v108
    %v110 = vpop.xlane.xlu0 %109
    %v111 = vsel %vm62, %v46, 0.0
    %112 = vadd.xlane.f32.xlu0 %v111
    %v113 = vpop.xlane.xlu0 %112
    %v114 = vsel %vm62, %v47, 0.0
    %115 = vadd.xlane.f32.xlu0 %v114
    %v116 = vpop.xlane.xlu0 %115
    %v117 = vsel %vm62, %v48, 0.0
    %118 = vadd.xlane.f32.xlu0 %v117
    %v119 = vpop.xlane.xlu0 %118
    %v120 = vsel %vm62, %v49, 0.0
    %121 = vadd.xlane.f32.xlu0 %v120
    %v122 = vpop.xlane.xlu0 %121
    %v123 = vsel %vm62, %v50, 0.0
    %124 = vadd.xlane.f32.xlu0 %v123
    %v125 = vpop.xlane.xlu0 %124
    %v126 = vsel %vm62, %v51, 0.0
    %127 = vadd.xlane.f32.xlu0 %v126
    %v128 = vpop.xlane.xlu0 %127
    %v129 = vsel %vm62, %v52, 0.0
    %130 = vadd.xlane.f32.xlu0 %v129
    %v131 = vpop.xlane.xlu0 %130
    %v132 = vsel %vm62, %v53, 0.0
    %133 = vadd.xlane.f32.xlu0 %v132
    %v134 = vpop.xlane.xlu0 %133
    %v135 = vsel %vm62, %v54, 0.0
    %136 = vadd.xlane.f32.xlu0 %v135
    %v137 = vpop.xlane.xlu0 %136
    %v138 = vsel %vm62, %v55, 0.0
    %139 = vadd.xlane.f32.xlu0 %v138
    %v140 = vpop.xlane.xlu0 %139
    %v141 = vsel %vm62, %v56, 0.0
    %142 = vadd.xlane.f32.xlu0 %v141
    %v143 = vpop.xlane.xlu0 %142
    %v144 = vsel %vm62, %v57, 0.0
    %145 = vadd.xlane.f32.xlu0 %v144
    %v146 = vpop.xlane.xlu0 %145
    %v147 = vsel %vm62, %v58, 0.0
    %148 = vadd.xlane.f32.xlu0 %v147
    %v149 = vpop.xlane.xlu0 %148
    %v150 = vsel %vm62, %v59, 0.0
    %151 = vadd.xlane.f32.xlu0 %v150
    %v152 = vpop.xlane.xlu0 %151
    %v153 = vsel %vm62, %v60, 0.0
    %154 = vadd.xlane.f32.xlu0 %v153
    %v155 = vpop.xlane.xlu0 %154
    %v156 = vsel %vm62, %v61, 0.0
    %157 = vadd.xlane.f32.xlu0 %v156
    %v158 = vpop.xlane.xlu0 %157
    %v191 = vlaneseq
    %v192 = vand.u32 %v191, 127
    %v193 = vlaneseq
    %v194 = vshrl.u32 %v193, 7
    %v195 = vsub.s32 %v192, %v194
    %v196 = vrot.slane %v65, %v195
    %v197 = vadd.s32 %v192, 4294967288
    %v198 = vlaneseq
    %v199 = vshrl.u32 %v198, 7
    %v200 = vsub.s32 %v197, %v199
    %v201 = vrot.slane %v68, %v200
    %vm202 = vcmask 130112
    %v203 = vsel %vm202, %v201, %v196
    %v204 = vadd.s32 %v192, 4294967280
    %v205 = vlaneseq
    %v206 = vshrl.u32 %v205, 7
    %v207 = vsub.s32 %v204, %v206
    %v208 = vrot.slane %v71, %v207
    %vm209 = vcmask 195712
    %v210 = vsel %vm209, %v208, %v203
    %v211 = vadd.s32 %v192, 4294967272
    %v212 = vlaneseq
    %v213 = vshrl.u32 %v212, 7
    %v214 = vsub.s32 %v211, %v213
    %v215 = vrot.slane %v74, %v214
    %vm216 = vcmask 261312
    %v217 = vsel %vm216, %v215, %v210
    %v218 = vlaneseq
    %v219 = vshrl.u32 %v218, 7
    %v220 = vsub.s32 %v192, %v219
    %v221 = vrot.slane %v77, %v220
    %v222 = vlaneseq
    %v223 = vshrl.u32 %v222, 7
    %v224 = vsub.s32 %v197, %v223
    %v225 = vrot.slane %v80, %v224
    %v226 = vsel %vm202, %v225, %v221
    %v227 = vlaneseq
    %v228 = vshrl.u32 %v227, 7
    %v229 = vsub.s32 %v204, %v228
    %v230 = vrot.slane %v83, %v229
    %v231 = vsel %vm209, %v230, %v226
    %v232 = vlaneseq
    %v233 = vshrl.u32 %v232, 7
    %v234 = vsub.s32 %v211, %v233
    %v235 = vrot.slane %v86, %v234
    %v236 = vsel %vm216, %v235, %v231
    %v237 = vlaneseq
    %v238 = vshrl.u32 %v237, 7
    %v239 = vsub.s32 %v192, %v238
    %v240 = vrot.slane %v89, %v239
    %v241 = vlaneseq
    %v242 = vshrl.u32 %v241, 7
    %v243 = vsub.s32 %v197, %v242
    %v244 = vrot.slane %v92, %v243
    %v245 = vsel %vm202, %v244, %v240
    %v246 = vlaneseq
    %v247 = vshrl.u32 %v246, 7
    %v248 = vsub.s32 %v204, %v247
    %v249 = vrot.slane %v95, %v248
    %v250 = vsel %vm209, %v249, %v245
    %v251 = vlaneseq
    %v252 = vshrl.u32 %v251, 7
    %v253 = vsub.s32 %v211, %v252
    %v254 = vrot.slane %v98, %v253
    %v255 = vsel %vm216, %v254, %v250
    %v256 = vlaneseq
    %v257 = vshrl.u32 %v256, 7
    %v258 = vsub.s32 %v192, %v257
    %v259 = vrot.slane %v101, %v258
    %v260 = vlaneseq
    %v261 = vshrl.u32 %v260, 7
    %v262 = vsub.s32 %v197, %v261
    %v263 = vrot.slane %v104, %v262
    %v264 = vsel %vm202, %v263, %v259
    %v265 = vlaneseq
    %v266 = vshrl.u32 %v265, 7
    %v267 = vsub.s32 %v204, %v266
    %v268 = vrot.slane %v107, %v267
    %v269 = vsel %vm209, %v268, %v264
    %v270 = vlaneseq
    %v271 = vshrl.u32 %v270, 7
    %v272 = vsub.s32 %v211, %v271
    %v273 = vrot.slane %v110, %v272
    %v274 = vsel %vm216, %v273, %v269
    %v275 = vlaneseq
    %v276 = vshrl.u32 %v275, 7
    %v277 = vsub.s32 %v192, %v276
    %v278 = vrot.slane %v113, %v277
    %v279 = vlaneseq
    %v280 = vshrl.u32 %v279, 7
    %v281 = vsub.s32 %v197, %v280
    %v282 = vrot.slane %v116, %v281
    %v283 = vsel %vm202, %v282, %v278
    %v284 = vlaneseq
    %v285 = vshrl.u32 %v284, 7
    %v286 = vsub.s32 %v204, %v285
    %v287 = vrot.slane %v119, %v286
    %v288 = vsel %vm209, %v287, %v283
    %v289 = vlaneseq
    %v290 = vshrl.u32 %v289, 7
    %v291 = vsub.s32 %v211, %v290
    %v292 = vrot.slane %v122, %v291
    %v293 = vsel %vm216, %v292, %v288
    %v294 = vlaneseq
    %v295 = vshrl.u32 %v294, 7
    %v296 = vsub.s32 %v192, %v295
    %v297 = vrot.slane %v125, %v296
    %v298 = vlaneseq
    %v299 = vshrl.u32 %v298, 7
    %v300 = vsub.s32 %v197, %v299
    %v301 = vrot.slane %v128, %v300
    %v302 = vsel %vm202, %v301, %v297
    %v303 = vlaneseq
    %v304 = vshrl.u32 %v303, 7
    %v305 = vsub.s32 %v204, %v304
    %v306 = vrot.slane %v131, %v305
    %v307 = vsel %vm209, %v306, %v302
    %v308 = vlaneseq
    %v309 = vshrl.u32 %v308, 7
    %v310 = vsub.s32 %v211, %v309
    %v311 = vrot.slane %v134, %v310
    %v312 = vsel %vm216, %v311, %v307
    %v313 = vlaneseq
    %v314 = vshrl.u32 %v313, 7
    %v315 = vsub.s32 %v192, %v314
    %v316 = vrot.slane %v137, %v315
    %v317 = vlaneseq
    %v318 = vshrl.u32 %v317, 7
    %v319 = vsub.s32 %v197, %v318
    %v320 = vrot.slane %v140, %v319
    %v321 = vsel %vm202, %v320, %v316
    %v322 = vlaneseq
    %v323 = vshrl.u32 %v322, 7
    %v324 = vsub.s32 %v204, %v323
    %v325 = vrot.slane %v143, %v324
    %v326 = vsel %vm209, %v325, %v321
    %v327 = vlaneseq
    %v328 = vshrl.u32 %v327, 7
    %v329 = vsub.s32 %v211, %v328
    %v330 = vrot.slane %v146, %v329
    %v331 = vsel %vm216, %v330, %v326
    %v332 = vlaneseq
    %v333 = vshrl.u32 %v332, 7
    %v334 = vsub.s32 %v192, %v333
    %v335 = vrot.slane %v149, %v334
    %v336 = vlaneseq
    %v337 = vshrl.u32 %v336, 7
    %v338 = vsub.s32 %v197, %v337
    %v339 = vrot.slane %v152, %v338
    %v340 = vsel %vm202, %v339, %v335
    %v341 = vlaneseq
    %v342 = vshrl.u32 %v341, 7
    %v343 = vsub.s32 %v204, %v342
    %v344 = vrot.slane %v155, %v343
    %v345 = vsel %vm209, %v344, %v340
    %v346 = vlaneseq
    %v347 = vshrl.u32 %v346, 7
    %v348 = vsub.s32 %v211, %v347
    %v349 = vrot.slane %v158, %v348
    %v350 = vsel %vm216, %v349, %v345
    %vm351 = vcmask 1041409
    %v352 = vsel %vm351, %v236, %v217
    %vm353 = vcmask 1042434
    %v354 = vsel %vm353, %v255, %v352
    %vm355 = vcmask 1043459
    %v356 = vsel %vm355, %v274, %v354
    %vm357 = vcmask 1044484
    %v358 = vsel %vm357, %v293, %v356
    %vm359 = vcmask 1045509
    %v360 = vsel %vm359, %v312, %v358
    %vm361 = vcmask 1046534
    %v362 = vsel %vm361, %v331, %v360
    %vm363 = vcmask 1047559
    %v364 = vsel %vm363, %v350, %v362
    %v366 = vadd.f32 %v29, %v364
    %vm367 = vcmask 261120
    %368 = vst.msk [vmem:[#allocation5] sm:$0xff] %vm367, %v366
    // Predicated region
    $region14: #{tpu_custom_call.1} parent=1 // pred_check
      %p369 = pneg %p23
    $region15: #{tpu_custom_call.1} parent=1 // pred_check_branch
      %371 = sbr.rel (%p369) target = $region17
    $region16: #{tpu_custom_call.1} parent=1 // pred_region
      %v372 = vld [vmem:[#allocation5] sm:$0xff]
      %v373 = vmul.f32 %v372, 0.015625
      %374 = vst.msk [vmem:[#allocation5] sm:$0xff] %vm367, %v373
    $region17: #{tpu_custom_call.1} parent=1 // pred_fallthru
      _
    // Predicated region
    $region18: #{tpu_custom_call.1} parent=1 // pred_check
      _
    $region19: #{tpu_custom_call.1} parent=1 // pred_check_branch
      %376 = sbr.rel (0) target = $region21
    $region20: #{tpu_custom_call.1} parent=1 // pred_region
      %s378 = ssub.s32 128, 128
      %379 = vsyncadd [#allocation4], %s378
      %s381 = sshll.u32 [#allocation5], 4
      %s382 = int_to_ptr.vmem [resolvable:$true] %s381
      %384 = dma.vmem_to_hbm [thread:$0]  %s382, 128, %s1, [#allocation4]
    $region21: #{tpu_custom_call.1} parent=1 // pred_fallthru
      _
    // Predicated region
    $region22: #{tpu_custom_call.1} parent=1 // pred_check
      _
    $region23: #{tpu_custom_call.1} parent=1 // pred_check_branch
      %386 = sbr.rel (0) target = $region25
    $region24: #{tpu_custom_call.1} parent=1 // pred_region
      %387 = dma.done [#allocation4], 128
    $region25: #{tpu_custom_call.1} parent=1 // pred_fallthru
      _
    %388 = vsyncpa [#allocation3], 1
    %389 = vsyncpa [#allocation4], 1

</llo_original>
